<compile_context>
chip_gen: v7x
topology: tpu7x:2x2x1
jax: 0.10.0
libtpu: 0.0.40
codegen_flags: <defaults>
</compile_context>

<pallas_src>
import math

import jax
import jax.numpy as jnp
from jax.experimental import pallas as pl
from jax.experimental.pallas import tpu as pltpu


def _round_up(v, m):
    return ((v + m - 1) // m) * m


def _make_padding_kernel(rows_block, L, patch_size, num_patches):
    P, N = patch_size, num_patches
    pad = N * P - L          # number of synthesized elements in the last patch

    def kernel(x_ref, o_ref):
        # x_ref: (rows_block, L)     o_ref: (rows_block, P*N)
        x = x_ref[...]
        if pad:
            # Tiny tail: repeat the last element `pad` times, then one
            # reshape + minor-dim swap + single full-block (lane-dense) store.
            last = x[:, L - 1:]                                   # (rows, 1)
            x = jnp.concatenate(
                [x, jnp.broadcast_to(last, (rows_block, pad))], axis=-1)
        y = jnp.swapaxes(x.reshape(rows_block, N, P), 1, 2)       # (rows, P, N)
        o_ref[...] = y.reshape(rows_block, P * N)                 # one unmasked store

    return kernel


def padding_forward(x, patch_size, *, rows_block=None):
    """x: (B, D, L) -> (B, D, patch_size, num_patches)."""
    B, D, L = x.shape
    P = int(patch_size)
    N = math.ceil(L / P)

    # ---- degenerate cases: pure metadata reshapes, skip the kernel ----
    if P == 1:
        return x.reshape(B, D, 1, L)
    if N == 1:
        pad = P - L
        if pad > 0:
            x = jnp.concatenate(
                [x, jnp.broadcast_to(x[:, :, -1:], (B, D, pad))], axis=-1)
        return x.reshape(B, D, P, 1)

    itemsize = jnp.dtype(x.dtype).itemsize
    # Packed sublane count: f32 -> 8, bf16/fp16 -> 16, int8/fp8 -> 32.
    row_align = max(8, 32 // itemsize)

    # ---- flatten (B, D) into one row axis (free metadata reshape) ----
    R = B * D
    x2 = x.reshape(R, L)

    # Real per-row tile bytes: lane dim rounded up to 128 (vreg/VMEM padding).
    in_row_bytes = _round_up(L, 128) * itemsize
    out_row_bytes = _round_up(P * N, 128) * itemsize
    per_row = in_row_bytes + out_row_bytes

    # ---- choose the row tile: full R if it fits, otherwise an aligned tile
    #      sized for ~4 MiB of in+out traffic per grid step. ----
    if rows_block is None:
        target_bytes = 4 * 1024 * 1024
        max_rows = max(row_align, target_bytes // per_row)
        if R <= max_rows:
            rows_block = R
        else:
            rows_block = max(row_align, (max_rows // row_align) * row_align)
    rows_block = min(int(rows_block), R)
    if rows_block != R and rows_block % row_align != 0:
        rows_block = max(row_align, (rows_block // row_align) * row_align)
    n_r = pl.cdiv(R, rows_block)

    in_bytes = rows_block * in_row_bytes
    out_bytes = rows_block * out_row_bytes

    # Generation-aware VMEM clamp (v7x: 64 MiB / TC; v5e/v6e: 128 MiB).
    try:
        vmem_cap = int(pltpu.get_tpu_info().vmem_capacity_bytes)
    except Exception:  # conservative fallback (assume v7x)
        vmem_cap = 64 * 2**20
    vmem_limit = int(min(vmem_cap // 2,
                         max(4 * 2**20, 4 * (in_bytes + out_bytes))))

    kernel = _make_padding_kernel(rows_block, L, P, N)

    out_flat = pl.pallas_call(
        kernel,
        out_shape=jax.ShapeDtypeStruct((R, P * N), x.dtype),
        grid_spec=pltpu.PrefetchScalarGridSpec(
            num_scalar_prefetch=0,
            grid=(n_r,),
            in_specs=[pl.BlockSpec((rows_block, L), lambda r: (r, 0))],
            out_specs=pl.BlockSpec((rows_block, P * N), lambda r: (r, 0)),
        ),
        compiler_params=pltpu.CompilerParams(
            dimension_semantics=("parallel",),
            vmem_limit_bytes=vmem_limit),
    )(x2)

    # Free metadata reshape back to the module's output layout.
    return out_flat.reshape(B, D, P, N)


def padding_reference(x, patch_size):
    """Pure-JAX reference mirroring the PyTorch module."""
    B, D, L = x.shape
    num_patches = math.ceil(L / patch_size)
    pad = num_patches * patch_size - L
    if pad > 0:
        last = x[:, :, -1:]
        x = jnp.concatenate([x, jnp.broadcast_to(last, (B, D, pad))], axis=-1)
    x = x.reshape(B, D, num_patches, patch_size)
    return jnp.transpose(x, (0, 1, 3, 2))


if __name__ == "__main__":
    key = jax.random.PRNGKey(0)

    # 1) Padding branch: B=2, D=4, L=10, patch_size=4 -> num_patches=3.
    B, D, L, P = 2, 4, 10, 4
    x = jax.random.normal(key, (B, D, L), dtype=jnp.float32)
    out = jax.block_until_ready(padding_forward(x, P))
    assert out.shape == (B, D, P, math.ceil(L / P)), out.shape
    assert jnp.allclose(out, padding_reference(x, P)), "mismatch (pad branch)"

    # 2) No-padding branch (L % patch_size == 0).
    x2 = jax.random.normal(jax.random.PRNGKey(1), (B, D, 8), dtype=jnp.float32)
    out2 = jax.block_until_ready(padding_forward(x2, P))
    assert jnp.allclose(out2, padding_reference(x2, P)), "mismatch (even L)"

    # 3) Multi-block row tiling (grid has >1 step), padding branch, f32.
    x3 = jax.random.normal(jax.random.PRNGKey(2), (2, 16, 13), dtype=jnp.float32)
    out3 = jax.block_until_ready(padding_forward(x3, P, rows_block=8))
    assert jnp.allclose(out3, padding_reference(x3, P)), "mismatch (row tiling)"

    # 4) bf16 (packed sublane alignment = 16), multi-block.
    x4 = jax.random.normal(jax.random.PRNGKey(3), (2, 32, 13),
                           dtype=jnp.bfloat16)
    out4 = jax.block_until_ready(padding_forward(x4, P, rows_block=16))
    assert jnp.array_equal(out4, padding_reference(x4, P)), "mismatch (bf16)"

    # 5) Degenerate short-circuits.
    x5 = jax.random.normal(jax.random.PRNGKey(4), (2, 4, 6), dtype=jnp.float32)
    assert jnp.allclose(padding_forward(x5, 1), padding_reference(x5, 1))
    assert jnp.allclose(padding_forward(x5, 8), padding_reference(x5, 8))

    print("KERNEL_OK")
</pallas_src>

<mosaic_0001>
module attributes {stable_mosaic.version = 11 : i64} {
  func.func @kernel(%arg0: i32, %arg1: memref<8x10xf32, #tpu.memory_space<vmem>>, %arg2: memref<8x12xf32, #tpu.memory_space<vmem>>) attributes {dimension_semantics = [#tpu.dimension_semantics<parallel>], iteration_bounds = array<i64: 1>, scalar_prefetch = 0 : i64, scratch_operands = 0 : i64, tpu.core_type = #tpu.core_type<tc>, window_params = [{transform_indices = @transform_0, window_bounds = array<i64: 8, 10>}, {transform_indices = @transform_1, window_bounds = array<i64: 8, 12>}]} {
    %c0 = arith.constant 0 : index
    %c0_0 = arith.constant 0 : index
    %0 = vector.load %arg1[%c0, %c0_0] : memref<8x10xf32, #tpu.memory_space<vmem>>, vector<8x10xf32>
    %1 = vector.extract_strided_slice %0 {offsets = [0, 9], sizes = [8, 1], strides = [1, 1]} : vector<8x10xf32> to vector<8x1xf32>
    %2 = vector.shape_cast %1 : vector<8x1xf32> to vector<8x1xf32>
    %3 = vector.broadcast %2 : vector<8x1xf32> to vector<8x2xf32>
    %4 = tpu.concatenate %0, %3 in 1 : vector<8x10xf32>, vector<8x2xf32> -> vector<8x12xf32>
    %5 = vector.shape_cast %4 : vector<8x12xf32> to vector<8x3x4xf32>
    %6 = tpu.transpose %5, [0, 2, 1] : vector<8x3x4xf32> -> vector<8x4x3xf32>
    %7 = vector.shape_cast %6 : vector<8x4x3xf32> to vector<8x12xf32>
    %c0_1 = arith.constant 0 : index
    %c0_2 = arith.constant 0 : index
    %8 = vector.load %arg2[%c0_1, %c0_2] : memref<8x12xf32, #tpu.memory_space<vmem>>, vector<8x12xf32>
    tpu.vector_store %arg2[%c0_1, %c0_2], %7 {strides = array<i32>} : memref<8x12xf32, #tpu.memory_space<vmem>>, vector<8x12xf32>,
    return
  }
  func.func @transform_0(%arg0: i32) -> (i32, i32) {
    %c0_i32 = arith.constant 0 : i32
    %c0_i32_0 = arith.constant 0 : i32
    return %arg0, %c0_i32 : i32, i32
  }
  func.func @transform_1(%arg0: i32) -> (i32, i32) {
    %c0_i32 = arith.constant 0 : i32
    %c0_i32_0 = arith.constant 0 : i32
    return %arg0, %c0_i32 : i32, i32
  }
}

</mosaic_0001>

<llo_original>
// kernel: tpu_custom_call.1
$region0: #{tpu_custom_call.1}
  #allocation0 [shape = 'u32[]', space=smem, size = 0x4, offset = 0x4, fixed_abs, tag = 'smem constant byte address 0x4 - core index']
  #allocation1 [shape = 'u32[144,128]{1,0:T(1,128)}', space=vmem, size = 0x12000, scoped, tag = 'internal scratch']
  %s0 = inlined_call_operand.hbm [shape: f32[8,10], index: 0, kind: input, shape index: {}]
  %s1 = inlined_call_operand.hbm [shape: f32[8,12], index: 1, kind: output, shape index: {}]
  %s2 = sld [smem:[#allocation0]]
  $region18: #{tpu_custom_call.1} parent=0
    _
  %s4 = ssub.s32 1, %s2
  %s5 = scalar_select 0, %s4, %s2
  $region1: #{tpu_custom_call.1} parent=0
    #allocation2 [shape = 'u8[4096]{0}', space=vmem, size = 0x1000, scoped, tag = 'input window, operand 0, single buffered']
    #allocation3 [shape = 's32[1]{0}', space=sflag, size = 0x4, scoped, tag = 'scoped memory for tpu_custom_call.1']
    #allocation4 [shape = 's32[1]{0}', space=sflag, size = 0x4, scoped, tag = 'scoped memory for tpu_custom_call.1']
    #allocation5 [shape = 'u8[4096]{0}', space=vmem, size = 0x1000, scoped, tag = 'output window, operand 0, single buffered']
    %6 = vsyncpa [#allocation3], 0
    %7 = vsyncpa [#allocation4], 0
    // Predicated region
    $region2: #{tpu_custom_call.1} parent=1 // pred_check
      _
    $region3: #{tpu_custom_call.1} parent=1 // pred_check_branch
      %9 = sbr.rel (0) target = $region5
    $region4: #{tpu_custom_call.1} parent=1 // pred_region
      %s11 = ssub.s32 128, 128
      %12 = vsyncadd [#allocation3], %s11
      %s14 = sshll.u32 [#allocation2], 4
      %s15 = int_to_ptr.vmem [resolvable:$true] %s14
      %17 = dma.hbm_to_vmem [thread:$0]  %s0, 128, %s15, [#allocation3]
    $region5: #{tpu_custom_call.1} parent=1 // pred_fallthru
      _
    // Predicated region
    $region6: #{tpu_custom_call.1} parent=1 // pred_check
      _
    $region7: #{tpu_custom_call.1} parent=1 // pred_check_branch
      %19 = sbr.rel (0) target = $region9
    $region8: #{tpu_custom_call.1} parent=1 // pred_region
      %20 = dma.done [#allocation3], 128
    $region9: #{tpu_custom_call.1} parent=1 // pred_fallthru
      _
    %v21 = vld [vmem:[#allocation2] sm:$0xff]
    %23 = vset.pattern.permute.xlu0 9
    %24 = vperm.xlu0 %23, %v21
    %v25 = vpop.permute.xlu0 %24
    %vm27 = vcmask 80896
    %v28 = vsel %vm27, %v21, %v25
    %30 = vrot.lane.b32.xlu0 %v28, 124
    %v31 = vpop.permute.xlu0 %30
    %33 = vrot.lane.b32.xlu0 %v28, 120
    %v34 = vpop.permute.xlu0 %33
    %v36 = vcombine.low %v28, %v34
    %v37 = vcombine.high %v28, %v34
    %v39 = vunpack.c.l.s4 1983009808
    %v40 = vunpack.c.0.s8 %v39
    %v41 = vlaneseq
    %v42 = vshrl.u32 %v41, 7
    %v43 = vsub.s32 %v40, %v42
    %v44 = vrot.slane %v36, %v43
    %v46 = vunpack.c.l.s4 1983009808
    %v47 = vunpack.c.0.s8 %v46
    %v48 = vlaneseq
    %v49 = vshrl.u32 %v48, 7
    %v50 = vsub.s32 %v47, %v49
    %v51 = vrot.slane %v37, %v50
    %v52 = vcombine.high %v31, 0.0
    %v54 = vunpack.c.l.s4 1983009808
    %v55 = vunpack.c.0.s8 %v54
    %v56 = vlaneseq
    %v57 = vshrl.u32 %v56, 7
    %v58 = vsub.s32 %v55, %v57
    %v59 = vrot.slane %v31, %v58
    %v61 = vunpack.c.l.s4 1983009808
    %v62 = vunpack.c.0.s8 %v61
    %v63 = vlaneseq
    %v64 = vshrl.u32 %v63, 7
    %v65 = vsub.s32 %v62, %v64
    %v66 = vrot.slane %v52, %v65
    %v67 = vcombine.low %v44, %v59
    %v68 = vcombine.high %v44, %v59
    %v70 = vunpack.c.l.s4 1934713408
    %v71 = vunpack.c.0.s8 %v70
    %v72 = vlaneseq
    %v73 = vshrl.u32 %v72, 7
    %v74 = vsub.s32 %v71, %v73
    %v75 = vrot.slane %v67, %v74
    %v77 = vunpack.c.l.s4 1934713408
    %v78 = vunpack.c.0.s8 %v77
    %v79 = vlaneseq
    %v80 = vshrl.u32 %v79, 7
    %v81 = vsub.s32 %v78, %v80
    %v82 = vrot.slane %v68, %v81
    %v83 = vcombine.low %v51, %v66
    %v84 = vcombine.high %v51, %v66
    %v86 = vunpack.c.l.s4 1934713408
    %v87 = vunpack.c.0.s8 %v86
    %v88 = vlaneseq
    %v89 = vshrl.u32 %v88, 7
    %v90 = vsub.s32 %v87, %v89
    %v91 = vrot.slane %v83, %v90
    %v93 = vunpack.c.l.s4 1934713408
    %v94 = vunpack.c.0.s8 %v93
    %v95 = vlaneseq
    %v96 = vshrl.u32 %v95, 7
    %v97 = vsub.s32 %v94, %v96
    %v98 = vrot.slane %v84, %v97
    %v99 = vcombine.high %v75, 0.0
    %v100 = vcombine.high %v82, 0.0
    %v101 = vcombine.high %v91, 0.0
    %v102 = vcombine.high %v98, 0.0
    %103 = vxpose.xlu0.b32.start [1/16] %v75, 128
    %104 = vxpose.xlu0.b32.cont [2/16] 0.0, 128
    %105 = vxpose.xlu0.b32.cont [3/16] 0.0, 128
    %106 = vxpose.xlu0.b32.cont [4/16] 0.0, 128
    %107 = vxpose.xlu0.b32.cont [5/16] 0.0, 128
    %108 = vxpose.xlu0.b32.cont [6/16] 0.0, 128
    %109 = vxpose.xlu0.b32.cont [7/16] 0.0, 128
    %110 = vxpose.xlu0.b32.cont [8/16] 0.0, 128
    %111 = vxpose.xlu0.b32.cont [9/16] 0.0, 128
    %112 = vxpose.xlu0.b32.cont [10/16] 0.0, 128
    %113 = vxpose.xlu0.b32.cont [11/16] 0.0, 128
    %114 = vxpose.xlu0.b32.cont [12/16] 0.0, 128
    %115 = vxpose.xlu0.b32.cont [13/16] 0.0, 128
    %116 = vxpose.xlu0.b32.cont [14/16] 0.0, 128
    %117 = vxpose.xlu0.b32.cont [15/16] 0.0, 128
    %118 = vxpose.xlu0.b32.end [16/16] 0.0, 128
    %v119 = vpop.trf.xlu0
    %v120 = vpop.trf.xlu0
    %v121 = vpop.trf.xlu0
    %v122 = vpop.trf.xlu0
    %v123 = vpop.trf.xlu0
    %v124 = vpop.trf.xlu0
    %v125 = vpop.trf.xlu0
    %v126 = vpop.trf.xlu0
    %v127 = vpop.trf.xlu0
    %v128 = vpop.trf.xlu0
    %v129 = vpop.trf.xlu0
    %v130 = vpop.trf.xlu0
    %v131 = vpop.trf.xlu0
    %v132 = vpop.trf.xlu0
    %v133 = vpop.trf.xlu0
    %v134 = vpop.trf.xlu0
    %135 = vxpose.xlu0.b32.start [1/16] %v99, 128
    %136 = vxpose.xlu0.b32.cont [2/16] 0.0, 128
    %137 = vxpose.xlu0.b32.cont [3/16] 0.0, 128
    %138 = vxpose.xlu0.b32.cont [4/16] 0.0, 128
    %139 = vxpose.xlu0.b32.cont [5/16] 0.0, 128
    %140 = vxpose.xlu0.b32.cont [6/16] 0.0, 128
    %141 = vxpose.xlu0.b32.cont [7/16] 0.0, 128
    %142 = vxpose.xlu0.b32.cont [8/16] 0.0, 128
    %143 = vxpose.xlu0.b32.cont [9/16] 0.0, 128
    %144 = vxpose.xlu0.b32.cont [10/16] 0.0, 128
    %145 = vxpose.xlu0.b32.cont [11/16] 0.0, 128
    %146 = vxpose.xlu0.b32.cont [12/16] 0.0, 128
    %147 = vxpose.xlu0.b32.cont [13/16] 0.0, 128
    %148 = vxpose.xlu0.b32.cont [14/16] 0.0, 128
    %149 = vxpose.xlu0.b32.cont [15/16] 0.0, 128
    %150 = vxpose.xlu0.b32.end [16/16] 0.0, 128
    %v151 = vpop.trf.xlu0
    %v152 = vpop.trf.xlu0
    %v153 = vpop.trf.xlu0
    %v154 = vpop.trf.xlu0
    %v155 = vpop.trf.xlu0
    %v156 = vpop.trf.xlu0
    %v157 = vpop.trf.xlu0
    %v158 = vpop.trf.xlu0
    %v159 = vpop.trf.xlu0
    %v160 = vpop.trf.xlu0
    %v161 = vpop.trf.xlu0
    %v162 = vpop.trf.xlu0
    %v163 = vpop.trf.xlu0
    %v164 = vpop.trf.xlu0
    %v165 = vpop.trf.xlu0
    %v166 = vpop.trf.xlu0
    %167 = vxpose.xlu0.b32.start [1/16] %v82, 128
    %168 = vxpose.xlu0.b32.cont [2/16] 0.0, 128
    %169 = vxpose.xlu0.b32.cont [3/16] 0.0, 128
    %170 = vxpose.xlu0.b32.cont [4/16] 0.0, 128
    %171 = vxpose.xlu0.b32.cont [5/16] 0.0, 128
    %172 = vxpose.xlu0.b32.cont [6/16] 0.0, 128
    %173 = vxpose.xlu0.b32.cont [7/16] 0.0, 128
    %174 = vxpose.xlu0.b32.cont [8/16] 0.0, 128
    %175 = vxpose.xlu0.b32.cont [9/16] 0.0, 128
    %176 = vxpose.xlu0.b32.cont [10/16] 0.0, 128
    %177 = vxpose.xlu0.b32.cont [11/16] 0.0, 128
    %178 = vxpose.xlu0.b32.cont [12/16] 0.0, 128
    %179 = vxpose.xlu0.b32.cont [13/16] 0.0, 128
    %180 = vxpose.xlu0.b32.cont [14/16] 0.0, 128
    %181 = vxpose.xlu0.b32.cont [15/16] 0.0, 128
    %182 = vxpose.xlu0.b32.end [16/16] 0.0, 128
    %v183 = vpop.trf.xlu0
    %v184 = vpop.trf.xlu0
    %v185 = vpop.trf.xlu0
    %v186 = vpop.trf.xlu0
    %v187 = vpop.trf.xlu0
    %v188 = vpop.trf.xlu0
    %v189 = vpop.trf.xlu0
    %v190 = vpop.trf.xlu0
    %v191 = vpop.trf.xlu0
    %v192 = vpop.trf.xlu0
    %v193 = vpop.trf.xlu0
    %v194 = vpop.trf.xlu0
    %v195 = vpop.trf.xlu0
    %v196 = vpop.trf.xlu0
    %v197 = vpop.trf.xlu0
    %v198 = vpop.trf.xlu0
    %199 = vxpose.xlu0.b32.start [1/16] %v100, 128
    %200 = vxpose.xlu0.b32.cont [2/16] 0.0, 128
    %201 = vxpose.xlu0.b32.cont [3/16] 0.0, 128
    %202 = vxpose.xlu0.b32.cont [4/16] 0.0, 128
    %203 = vxpose.xlu0.b32.cont [5/16] 0.0, 128
    %204 = vxpose.xlu0.b32.cont [6/16] 0.0, 128
    %205 = vxpose.xlu0.b32.cont [7/16] 0.0, 128
    %206 = vxpose.xlu0.b32.cont [8/16] 0.0, 128
    %207 = vxpose.xlu0.b32.cont [9/16] 0.0, 128
    %208 = vxpose.xlu0.b32.cont [10/16] 0.0, 128
    %209 = vxpose.xlu0.b32.cont [11/16] 0.0, 128
    %210 = vxpose.xlu0.b32.cont [12/16] 0.0, 128
    %211 = vxpose.xlu0.b32.cont [13/16] 0.0, 128
    %212 = vxpose.xlu0.b32.cont [14/16] 0.0, 128
    %213 = vxpose.xlu0.b32.cont [15/16] 0.0, 128
    %214 = vxpose.xlu0.b32.end [16/16] 0.0, 128
    %v215 = vpop.trf.xlu0
    %v216 = vpop.trf.xlu0
    %v217 = vpop.trf.xlu0
    %v218 = vpop.trf.xlu0
    %v219 = vpop.trf.xlu0
    %v220 = vpop.trf.xlu0
    %v221 = vpop.trf.xlu0
    %v222 = vpop.trf.xlu0
    %v223 = vpop.trf.xlu0
    %v224 = vpop.trf.xlu0
    %v225 = vpop.trf.xlu0
    %v226 = vpop.trf.xlu0
    %v227 = vpop.trf.xlu0
    %v228 = vpop.trf.xlu0
    %v229 = vpop.trf.xlu0
    %v230 = vpop.trf.xlu0
    %231 = vxpose.xlu0.b32.start [1/16] %v91, 128
    %232 = vxpose.xlu0.b32.cont [2/16] 0.0, 128
    %233 = vxpose.xlu0.b32.cont [3/16] 0.0, 128
    %234 = vxpose.xlu0.b32.cont [4/16] 0.0, 128
    %235 = vxpose.xlu0.b32.cont [5/16] 0.0, 128
    %236 = vxpose.xlu0.b32.cont [6/16] 0.0, 128
    %237 = vxpose.xlu0.b32.cont [7/16] 0.0, 128
    %238 = vxpose.xlu0.b32.cont [8/16] 0.0, 128
    %239 = vxpose.xlu0.b32.cont [9/16] 0.0, 128
    %240 = vxpose.xlu0.b32.cont [10/16] 0.0, 128
    %241 = vxpose.xlu0.b32.cont [11/16] 0.0, 128
    %242 = vxpose.xlu0.b32.cont [12/16] 0.0, 128
    %243 = vxpose.xlu0.b32.cont [13/16] 0.0, 128
    %244 = vxpose.xlu0.b32.cont [14/16] 0.0, 128
    %245 = vxpose.xlu0.b32.cont [15/16] 0.0, 128
    %246 = vxpose.xlu0.b32.end [16/16] 0.0, 128
    %v247 = vpop.trf.xlu0
    %v248 = vpop.trf.xlu0
    %v249 = vpop.trf.xlu0
    %v250 = vpop.trf.xlu0
    %v251 = vpop.trf.xlu0
    %v252 = vpop.trf.xlu0
    %v253 = vpop.trf.xlu0
    %v254 = vpop.trf.xlu0
    %v255 = vpop.trf.xlu0
    %v256 = vpop.trf.xlu0
    %v257 = vpop.trf.xlu0
    %v258 = vpop.trf.xlu0
    %v259 = vpop.trf.xlu0
    %v260 = vpop.trf.xlu0
    %v261 = vpop.trf.xlu0
    %v262 = vpop.trf.xlu0
    %263 = vxpose.xlu0.b32.start [1/16] %v101, 128
    %264 = vxpose.xlu0.b32.cont [2/16] 0.0, 128
    %265 = vxpose.xlu0.b32.cont [3/16] 0.0, 128
    %266 = vxpose.xlu0.b32.cont [4/16] 0.0, 128
    %267 = vxpose.xlu0.b32.cont [5/16] 0.0, 128
    %268 = vxpose.xlu0.b32.cont [6/16] 0.0, 128
    %269 = vxpose.xlu0.b32.cont [7/16] 0.0, 128
    %270 = vxpose.xlu0.b32.cont [8/16] 0.0, 128
    %271 = vxpose.xlu0.b32.cont [9/16] 0.0, 128
    %272 = vxpose.xlu0.b32.cont [10/16] 0.0, 128
    %273 = vxpose.xlu0.b32.cont [11/16] 0.0, 128
    %274 = vxpose.xlu0.b32.cont [12/16] 0.0, 128
    %275 = vxpose.xlu0.b32.cont [13/16] 0.0, 128
    %276 = vxpose.xlu0.b32.cont [14/16] 0.0, 128
    %277 = vxpose.xlu0.b32.cont [15/16] 0.0, 128
    %278 = vxpose.xlu0.b32.end [16/16] 0.0, 128
    %v279 = vpop.trf.xlu0
    %v280 = vpop.trf.xlu0
    %v281 = vpop.trf.xlu0
    %v282 = vpop.trf.xlu0
    %v283 = vpop.trf.xlu0
    %v284 = vpop.trf.xlu0
    %v285 = vpop.trf.xlu0
    %v286 = vpop.trf.xlu0
    %v287 = vpop.trf.xlu0
    %v288 = vpop.trf.xlu0
    %v289 = vpop.trf.xlu0
    %v290 = vpop.trf.xlu0
    %v291 = vpop.trf.xlu0
    %v292 = vpop.trf.xlu0
    %v293 = vpop.trf.xlu0
    %v294 = vpop.trf.xlu0
    %295 = vxpose.xlu0.b32.start [1/16] %v98, 128
    %296 = vxpose.xlu0.b32.cont [2/16] 0.0, 128
    %297 = vxpose.xlu0.b32.cont [3/16] 0.0, 128
    %298 = vxpose.xlu0.b32.cont [4/16] 0.0, 128
    %299 = vxpose.xlu0.b32.cont [5/16] 0.0, 128
    %300 = vxpose.xlu0.b32.cont [6/16] 0.0, 128
    %301 = vxpose.xlu0.b32.cont [7/16] 0.0, 128
    %302 = vxpose.xlu0.b32.cont [8/16] 0.0, 128
    %303 = vxpose.xlu0.b32.cont [9/16] 0.0, 128
    %304 = vxpose.xlu0.b32.cont [10/16] 0.0, 128
    %305 = vxpose.xlu0.b32.cont [11/16] 0.0, 128
    %306 = vxpose.xlu0.b32.cont [12/16] 0.0, 128
    %307 = vxpose.xlu0.b32.cont [13/16] 0.0, 128
    %308 = vxpose.xlu0.b32.cont [14/16] 0.0, 128
    %309 = vxpose.xlu0.b32.cont [15/16] 0.0, 128
    %310 = vxpose.xlu0.b32.end [16/16] 0.0, 128
    %v311 = vpop.trf.xlu0
    %v312 = vpop.trf.xlu0
    %v313 = vpop.trf.xlu0
    %v314 = vpop.trf.xlu0
    %v315 = vpop.trf.xlu0
    %v316 = vpop.trf.xlu0
    %v317 = vpop.trf.xlu0
    %v318 = vpop.trf.xlu0
    %v319 = vpop.trf.xlu0
    %v320 = vpop.trf.xlu0
    %v321 = vpop.trf.xlu0
    %v322 = vpop.trf.xlu0
    %v323 = vpop.trf.xlu0
    %v324 = vpop.trf.xlu0
    %v325 = vpop.trf.xlu0
    %v326 = vpop.trf.xlu0
    %327 = vxpose.xlu0.b32.start [1/16] %v102, 128
    %328 = vxpose.xlu0.b32.cont [2/16] 0.0, 128
    %329 = vxpose.xlu0.b32.cont [3/16] 0.0, 128
    %330 = vxpose.xlu0.b32.cont [4/16] 0.0, 128
    %331 = vxpose.xlu0.b32.cont [5/16] 0.0, 128
    %332 = vxpose.xlu0.b32.cont [6/16] 0.0, 128
    %333 = vxpose.xlu0.b32.cont [7/16] 0.0, 128
    %334 = vxpose.xlu0.b32.cont [8/16] 0.0, 128
    %335 = vxpose.xlu0.b32.cont [9/16] 0.0, 128
    %336 = vxpose.xlu0.b32.cont [10/16] 0.0, 128
    %337 = vxpose.xlu0.b32.cont [11/16] 0.0, 128
    %338 = vxpose.xlu0.b32.cont [12/16] 0.0, 128
    %339 = vxpose.xlu0.b32.cont [13/16] 0.0, 128
    %340 = vxpose.xlu0.b32.cont [14/16] 0.0, 128
    %341 = vxpose.xlu0.b32.cont [15/16] 0.0, 128
    %342 = vxpose.xlu0.b32.end [16/16] 0.0, 128
    %v343 = vpop.trf.xlu0
    %v344 = vpop.trf.xlu0
    %v345 = vpop.trf.xlu0
    %v346 = vpop.trf.xlu0
    %v347 = vpop.trf.xlu0
    %v348 = vpop.trf.xlu0
    %v349 = vpop.trf.xlu0
    %v350 = vpop.trf.xlu0
    %v351 = vpop.trf.xlu0
    %v352 = vpop.trf.xlu0
    %v353 = vpop.trf.xlu0
    %v354 = vpop.trf.xlu0
    %v355 = vpop.trf.xlu0
    %v356 = vpop.trf.xlu0
    %v357 = vpop.trf.xlu0
    %v358 = vpop.trf.xlu0
    %v359 = vcombine.low %v119, %v183
    %v361 = vunpack.c.l.s4 1983009808
    %v362 = vunpack.c.0.s8 %v361
    %v363 = vlaneseq
    %v364 = vshrl.u32 %v363, 7
    %v365 = vsub.s32 %v362, %v364
    %v366 = vrot.slane %v359, %v365
    %v367 = vcombine.low %v151, %v215
    %v369 = vunpack.c.l.s4 1983009808
    %v370 = vunpack.c.0.s8 %v369
    %v371 = vlaneseq
    %v372 = vshrl.u32 %v371, 7
    %v373 = vsub.s32 %v370, %v372
    %v374 = vrot.slane %v367, %v373
    %v375 = vcombine.low %v247, %v311
    %v377 = vunpack.c.l.s4 1983009808
    %v378 = vunpack.c.0.s8 %v377
    %v379 = vlaneseq
    %v380 = vshrl.u32 %v379, 7
    %v381 = vsub.s32 %v378, %v380
    %v382 = vrot.slane %v375, %v381
    %v383 = vcombine.low %v279, %v343
    %v385 = vunpack.c.l.s4 1983009808
    %v386 = vunpack.c.0.s8 %v385
    %v387 = vlaneseq
    %v388 = vshrl.u32 %v387, 7
    %v389 = vsub.s32 %v386, %v388
    %v390 = vrot.slane %v383, %v389
    %v391 = vcombine.low %v366, %v374
    %v392 = vcombine.high %v366, %v374
    %v394 = vunpack.c.l.s4 1934713408
    %v395 = vunpack.c.0.s8 %v394
    %v396 = vlaneseq
    %v397 = vshrl.u32 %v396, 7
    %v398 = vsub.s32 %v395, %v397
    %v399 = vrot.slane %v391, %v398
    %v401 = vunpack.c.l.s4 1934713408
    %v402 = vunpack.c.0.s8 %v401
    %v403 = vlaneseq
    %v404 = vshrl.u32 %v403, 7
    %v405 = vsub.s32 %v402, %v404
    %v406 = vrot.slane %v392, %v405
    %v407 = vcombine.low %v382, %v390
    %v408 = vcombine.high %v382, %v390
    %v410 = vunpack.c.l.s4 1934713408
    %v411 = vunpack.c.0.s8 %v410
    %v412 = vlaneseq
    %v413 = vshrl.u32 %v412, 7
    %v414 = vsub.s32 %v411, %v413
    %v415 = vrot.slane %v407, %v414
    %v417 = vunpack.c.l.s4 1934713408
    %v418 = vunpack.c.0.s8 %v417
    %v419 = vlaneseq
    %v420 = vshrl.u32 %v419, 7
    %v421 = vsub.s32 %v418, %v420
    %v422 = vrot.slane %v408, %v421
    %v423 = vcombine.low %v399, %v415
    %v424 = vcombine.high %v399, %v415
    %v425 = vcombine.low %v406, %v422
    %v426 = vcombine.high %v406, %v422
    %428 = vrot.lane.b32.xlu0 %v424, 3
    %v429 = vpop.permute.xlu0 %428
    %432 = vrot.lane.b32.xlu0 %v425, 6
    %v433 = vpop.permute.xlu0 %432
    %436 = vrot.lane.b32.xlu0 %v426, 9
    %v437 = vpop.permute.xlu0 %436
    %vm439 = vcmask 23552
    %v440 = vsel %vm439, %v423, %v429
    %vm441 = vcmask 48128
    %v442 = vsel %vm441, %v440, %v433
    %vm443 = vcmask 72704
    %v444 = vsel %vm443, %v442, %v437
    %vm445 = vcmask 97280
    %446 = vst.msk [vmem:[#allocation5] sm:$0xff] %vm445, %v444
    // Predicated region
    $region10: #{tpu_custom_call.1} parent=1 // pred_check
      _
    $region11: #{tpu_custom_call.1} parent=1 // pred_check_branch
      %448 = sbr.rel (0) target = $region13
    $region12: #{tpu_custom_call.1} parent=1 // pred_region
      %s450 = ssub.s32 128, 128
      %451 = vsyncadd [#allocation4], %s450
      %s453 = sshll.u32 [#allocation5], 4
      %s454 = int_to_ptr.vmem [resolvable:$true] %s453
      %456 = dma.vmem_to_hbm [thread:$0]  %s454, 128, %s1, [#allocation4]
    $region13: #{tpu_custom_call.1} parent=1 // pred_fallthru
      _
    // Predicated region
    $region14: #{tpu_custom_call.1} parent=1 // pred_check
      _
    $region15: #{tpu_custom_call.1} parent=1 // pred_check_branch
      %458 = sbr.rel (0) target = $region17
    $region16: #{tpu_custom_call.1} parent=1 // pred_region
      %459 = dma.done [#allocation4], 128
    $region17: #{tpu_custom_call.1} parent=1 // pred_fallthru
      _
    %460 = vsyncpa [#allocation3], 1
    %461 = vsyncpa [#allocation4], 1

</llo_original>
